<compile_context>
chip_gen: v7x
topology: tpu7x:2x2x1
jax: 0.10.0
libtpu: 0.0.40
codegen_flags: <defaults>
</compile_context>

<pallas_src>
import jax
import jax.numpy as jnp
from jax.experimental import pallas as pl
from jax.experimental.pallas import tpu as pltpu


def _logreg_kernel(x_ref, w_ref, b_ref, o_ref, acc_ref):
    # x_ref: (tile_b, tile_f) VMEM; w_ref: (1, tile_f) VMEM (lane-dense);
    # b_ref: (1, 1) SMEM scalar; o_ref: (tile_b, 1); acc_ref: (tile_b, 1) f32 scratch.
    k = pl.program_id(1)

    @pl.when(k == 0)
    def _():
        acc_ref[...] = jnp.zeros_like(acc_ref)

    # VPU broadcast-multiply + XLU lane reduction (avoids a 1-column MXU matmul).
    prod = x_ref[...].astype(jnp.float32) * w_ref[...].astype(jnp.float32)
    acc_ref[...] += jnp.sum(prod, axis=-1, keepdims=True)

    @pl.when(k == pl.num_programs(1) - 1)
    def _():
        logits = acc_ref[...] + b_ref[0, 0]
        # Output last dim is 1 (matches nn.Linear(F, 1)); output bytes are 1/F of total
        # traffic so the masked-store cost is negligible next to reading x.
        o_ref[...] = jax.nn.sigmoid(logits).astype(o_ref.dtype)


_TARGET_X_TILE_BYTES = 4 * 1024 * 1024   # ~4 MiB x tile: >=85% HBM roofline, v7x-safe
_MAX_TILE_F = 8192                        # tile the feature axis beyond this width


def _largest_divisor_leq(n, cap, step):
    """Largest multiple of `step` that divides n and is <= cap, else None."""
    d = (min(cap, n) // step) * step
    while d >= step:
        if n % d == 0:
            return d
        d -= step
    return None


def _pick_tiles(B, F, itemsize):
    # Feature tiling: only when F is very wide (keeps the lane axis dense & 128-aligned).
    tile_f = F
    if F > _MAX_TILE_F and F % 128 == 0:
        tf = _largest_divisor_leq(F, _MAX_TILE_F, 128)
        if tf is not None:
            tile_f = tf
    # Batch tiling: ~4 MiB per x tile, multiple of 8 rows, dividing B.
    tile_b = B
    if B % 8 == 0:
        target_rows = max(8, _TARGET_X_TILE_BYTES // (tile_f * itemsize))
        tb = _largest_divisor_leq(B, target_rows, 8)
        if tb is not None:
            tile_b = tb
    # TODO(synk): ragged batches (B % 8 != 0) fall back to one full-batch block; pad B
    # outside the kernel if such batches are ever large.
    return tile_b, tile_f


def logistic_regression(x, weight, bias, *, tile_b=None, tile_f=None):
    """x: (B, F); weight: (1, F) (PyTorch nn.Linear layout); bias: (1,). Returns (B, 1)."""
    B, F = x.shape
    itemsize = jnp.dtype(x.dtype).itemsize
    auto_b, auto_f = _pick_tiles(B, F, itemsize)
    tile_b = auto_b if tile_b is None else tile_b
    tile_f = auto_f if tile_f is None else tile_f
    assert B % tile_b == 0 and (tile_b % 8 == 0 or tile_b == B)
    assert F % tile_f == 0 and (tile_f % 128 == 0 or tile_f == F)

    w = weight.reshape(1, F)                      # keep weight lane-dense (no transpose)
    b2 = bias.reshape(1, 1).astype(jnp.float32)   # scalar in SMEM

    grid = (B // tile_b, F // tile_f)
    return pl.pallas_call(
        _logreg_kernel,
        out_shape=jax.ShapeDtypeStruct((B, 1), x.dtype),
        grid_spec=pltpu.PrefetchScalarGridSpec(
            num_scalar_prefetch=0,
            grid=grid,
            in_specs=[
                pl.BlockSpec((tile_b, tile_f), lambda i, k: (i, k)),   # x tile
                pl.BlockSpec((1, tile_f), lambda i, k: (0, k)),        # weight row (lane-dense)
                pl.BlockSpec(memory_space=pltpu.MemorySpace.SMEM),     # bias scalar in SMEM
            ],
            out_specs=pl.BlockSpec((tile_b, 1), lambda i, k: (i, 0)),  # resident across k
            scratch_shapes=[pltpu.VMEM((tile_b, 1), jnp.float32)],
        ),
        compiler_params=pltpu.CompilerParams(
            dimension_semantics=("parallel", "arbitrary")),
    )(x, w, b2)


if __name__ == "__main__":
    key = jax.random.PRNGKey(0)
    batch, num_features = 8, 32

    x = jax.random.normal(key, (batch, num_features), dtype=jnp.float32)

    # Parameters initialized exactly as the PyTorch module __init__ (zeros).
    weight = jnp.zeros((1, num_features), dtype=jnp.float32)
    bias = jnp.zeros((1,), dtype=jnp.float32)

    probas = jax.block_until_ready(logistic_regression(x, weight, bias))
    ref = jax.nn.sigmoid(x @ weight.T + bias)
    assert probas.shape == (batch, 1)
    assert jnp.allclose(probas, ref, atol=1e-6), (probas, ref)

    # Secondary sanity check with non-zero parameters (exercises the real math path).
    kw, kb = jax.random.split(jax.random.PRNGKey(1))
    w2 = jax.random.normal(kw, (1, num_features), dtype=jnp.float32) * 0.1
    b2 = jax.random.normal(kb, (1,), dtype=jnp.float32)
    probas2 = jax.block_until_ready(logistic_regression(x, w2, b2))
    ref2 = jax.nn.sigmoid(x @ w2.T + b2)
    assert jnp.allclose(probas2, ref2, atol=1e-5, rtol=1e-5), (probas2, ref2)

    print("KERNEL_OK")
</pallas_src>

<mosaic_0001>
module attributes {stable_mosaic.version = 11 : i64} {
  func.func @_logreg_kernel(%arg0: i32, %arg1: i32, %arg2: memref<8x32xf32, #tpu.memory_space<vmem>>, %arg3: memref<1x32xf32, #tpu.memory_space<vmem>>, %arg4: memref<1x1xf32, #tpu.memory_space<smem>>, %arg5: memref<8x1xf32, #tpu.memory_space<vmem>>, %arg6: memref<8x1xf32, #tpu.memory_space<vmem>>) attributes {dimension_semantics = [#tpu.dimension_semantics<parallel>, #tpu.dimension_semantics<arbitrary>], iteration_bounds = array<i64: 1, 1>, scalar_prefetch = 0 : i64, scratch_operands = 1 : i64, tpu.core_type = #tpu.core_type<tc>, window_params = [{transform_indices = @transform_0, window_bounds = array<i64: 8, 32>}, {transform_indices = @transform_1, window_bounds = array<i64: 1, 32>}, {transform_indices = @transform_2, window_bounds = array<i64: 1, 1>}, {transform_indices = @transform_3, window_bounds = array<i64: 8, 1>}]} {
    %c0_i32 = arith.constant 0 : i32
    %0 = arith.cmpi eq, %arg1, %c0_i32 : i32
    %1 = arith.extui %0 : i1 to i32
    %c0_i32_0 = arith.constant 0 : i32
    %2 = arith.cmpi ne, %1, %c0_i32_0 : i32
    scf.if %2 {
      %cst_10 = arith.constant 0.000000e+00 : f32
      %15 = vector.broadcast %cst_10 : f32 to vector<8x1xf32>
      %c0_11 = arith.constant 0 : index
      %c0_12 = arith.constant 0 : index
      %16 = vector.load %arg6[%c0_11, %c0_12] : memref<8x1xf32, #tpu.memory_space<vmem>>, vector<8x1xf32>
      tpu.vector_store %arg6[%c0_11, %c0_12], %15 {strides = array<i32>} : memref<8x1xf32, #tpu.memory_space<vmem>>, vector<8x1xf32>,
    } else {
    }
    %c0 = arith.constant 0 : index
    %c0_1 = arith.constant 0 : index
    %3 = vector.load %arg2[%c0, %c0_1] : memref<8x32xf32, #tpu.memory_space<vmem>>, vector<8x32xf32>
    %c0_2 = arith.constant 0 : index
    %c0_3 = arith.constant 0 : index
    %4 = vector.load %arg3[%c0_2, %c0_3] : memref<1x32xf32, #tpu.memory_space<vmem>>, vector<1x32xf32>
    %5 = vector.broadcast %4 : vector<1x32xf32> to vector<8x32xf32>
    %6 = arith.mulf %3, %5 : vector<8x32xf32>
    %c0_4 = arith.constant 0 : index
    %c0_5 = arith.constant 0 : index
    %7 = vector.load %arg6[%c0_4, %c0_5] : memref<8x1xf32, #tpu.memory_space<vmem>>, vector<8x1xf32>
    %cst = arith.constant dense<0.000000e+00> : vector<8xf32>
    %8 = vector.multi_reduction <add>, %6, %cst [1] : vector<8x32xf32> to vector<8xf32>
    %9 = vector.shape_cast %8 : vector<8xf32> to vector<8x1xf32>
    %10 = arith.addf %7, %9 : vector<8x1xf32>
    %c0_6 = arith.constant 0 : index
    %c0_7 = arith.constant 0 : index
    %11 = vector.load %arg6[%c0_6, %c0_7] : memref<8x1xf32, #tpu.memory_space<vmem>>, vector<8x1xf32>
    tpu.vector_store %arg6[%c0_6, %c0_7], %10 {strides = array<i32>} : memref<8x1xf32, #tpu.memory_space<vmem>>, vector<8x1xf32>,
    %c0_i32_8 = arith.constant 0 : i32
    %12 = arith.cmpi eq, %arg1, %c0_i32_8 : i32
    %13 = arith.extui %12 : i1 to i32
    %c0_i32_9 = arith.constant 0 : i32
    %14 = arith.cmpi ne, %13, %c0_i32_9 : i32
    scf.if %14 {
      %c0_10 = arith.constant 0 : index
      %c0_11 = arith.constant 0 : index
      %15 = vector.load %arg6[%c0_10, %c0_11] : memref<8x1xf32, #tpu.memory_space<vmem>>, vector<8x1xf32>
      %c0_12 = arith.constant 0 : index
      %c0_13 = arith.constant 0 : index
      %16 = memref.load %arg4[%c0_12, %c0_13] : memref<1x1xf32, #tpu.memory_space<smem>>
      %17 = vector.broadcast %16 : f32 to vector<8x1xf32>
      %18 = arith.addf %15, %17 : vector<8x1xf32>
      %19 = arith.negf %18 : vector<8x1xf32>
      %20 = math.exp %19 : vector<8x1xf32>
      %cst_14 = arith.constant 1.000000e+00 : f32
      %21 = vector.broadcast %cst_14 : f32 to vector<8x1xf32>
      %22 = arith.addf %21, %20 : vector<8x1xf32>
      %23 = arith.divf %21, %22 : vector<8x1xf32>
      %c0_15 = arith.constant 0 : index
      %c0_16 = arith.constant 0 : index
      %24 = vector.load %arg5[%c0_15, %c0_16] : memref<8x1xf32, #tpu.memory_space<vmem>>, vector<8x1xf32>
      tpu.vector_store %arg5[%c0_15, %c0_16], %23 {strides = array<i32>} : memref<8x1xf32, #tpu.memory_space<vmem>>, vector<8x1xf32>,
    } else {
    }
    return
  }
  func.func @transform_0(%arg0: i32, %arg1: i32) -> (i32, i32) {
    %c0_i32 = arith.constant 0 : i32
    return %arg0, %arg1 : i32, i32
  }
  func.func @transform_1(%arg0: i32, %arg1: i32) -> (i32, i32) {
    %c0_i32 = arith.constant 0 : i32
    %c0_i32_0 = arith.constant 0 : i32
    return %c0_i32, %arg1 : i32, i32
  }
  func.func @transform_2(%arg0: i32, %arg1: i32) -> (i32, i32) {
    %c0_i32 = arith.constant 0 : i32
    %c0_i32_0 = arith.constant 0 : i32
    %c0_i32_1 = arith.constant 0 : i32
    return %c0_i32, %c0_i32_0 : i32, i32
  }
  func.func @transform_3(%arg0: i32, %arg1: i32) -> (i32, i32) {
    %c0_i32 = arith.constant 0 : i32
    %c0_i32_0 = arith.constant 0 : i32
    return %arg0, %c0_i32 : i32, i32
  }
}

</mosaic_0001>

<llo_original>
// kernel: tpu_custom_call.1
$region0: #{tpu_custom_call.1}
  #allocation0 [shape = 'u32[]', space=smem, size = 0x4, offset = 0x4, fixed_abs, tag = 'smem constant byte address 0x4 - core index']
  #allocation1 [shape = 'u32[144,128]{1,0:T(1,128)}', space=vmem, size = 0x12000, scoped, tag = 'internal scratch']
  #allocation2 [shape = 'f32[8,1]{1,0:T(8,128)}', space=vmem, size = 0x1000, scoped, tag = 'scratch operand']
  #allocation3 [shape = 'f32[1,1]{1,0:T(1,128)S(6)}', space=smem, size = 0x200, scoped, tag = 'scoped memory for tpu_custom_call.1']
  %s0 = inlined_call_operand.hbm [shape: f32[8,32], index: 0, kind: input, shape index: {}]
  %s1 = inlined_call_operand.vmem [shape: f32[1,32], index: 1, kind: input, shape index: {}]
  %s2 = inlined_call_operand.<no memory space> [shape: f32[1,1], index: 2, kind: input, shape index: {}]
  %s3 = inlined_call_operand.vmem [shape: f32[8,1], index: 3, kind: output, shape index: {}]
  %s4 = sld [smem:[#allocation0]]
  $region34: #{tpu_custom_call.1} parent=0
    _
  %s6 = ssub.s32 1, %s4
  %s7 = scalar_select 0, %s6, %s4
  %8 = sst [smem:[#allocation3]] %s2
  $region1: #{tpu_custom_call.1} parent=0
    #allocation4 [shape = 'u8[4096]{0}', space=vmem, size = 0x1000, scoped, tag = 'input window, operand 0, single buffered']
    #allocation5 [shape = 's32[1]{0}', space=sflag, size = 0x4, scoped, tag = 'scoped memory for tpu_custom_call.1']
    %9 = vsyncpa [#allocation5], 0
    // Predicated region
    $region2: #{tpu_custom_call.1} parent=1 // pred_check
      _
    $region3: #{tpu_custom_call.1} parent=1 // pred_check_branch
      %11 = sbr.rel (0) target = $region5
    $region4: #{tpu_custom_call.1} parent=1 // pred_region
      %s13 = ssub.s32 128, 128
      %14 = vsyncadd [#allocation5], %s13
      %s16 = sshll.u32 [#allocation4], 4
      %s17 = int_to_ptr.vmem [resolvable:$true] %s16
      %19 = dma.hbm_to_vmem [thread:$0]  %s0, 128, %s17, [#allocation5]
    $region5: #{tpu_custom_call.1} parent=1 // pred_fallthru
      _
    // Predicated region
    $region6: #{tpu_custom_call.1} parent=1 // pred_check
      _
    $region7: #{tpu_custom_call.1} parent=1 // pred_check_branch
      %21 = sbr.rel (0) target = $region9
    $region8: #{tpu_custom_call.1} parent=1 // pred_region
      _
    $region9: #{tpu_custom_call.1} parent=1 // pred_fallthru
      _
    // Predicated region
    $region10: #{tpu_custom_call.1} parent=1 // pred_check
      _
    $region11: #{tpu_custom_call.1} parent=1 // pred_check_branch
      %23 = sbr.rel (0) target = $region13
    $region12: #{tpu_custom_call.1} parent=1 // pred_region
      _
    $region13: #{tpu_custom_call.1} parent=1 // pred_fallthru
      _
    // Predicated region
    $region14: #{tpu_custom_call.1} parent=1 // pred_check
      _
    $region15: #{tpu_custom_call.1} parent=1 // pred_check_branch
      %25 = sbr.rel (0) target = $region17
    $region16: #{tpu_custom_call.1} parent=1 // pred_region
      %26 = dma.done [#allocation5], 128
    $region17: #{tpu_custom_call.1} parent=1 // pred_fallthru
      _
    %p27 = scmp.eq.s32.totalorder 0, 0
    // Predicated region
    $region18: #{tpu_custom_call.1} parent=1 // pred_check
      %p28 = pneg %p27
    $region19: #{tpu_custom_call.1} parent=1 // pred_check_branch
      %30 = sbr.rel (%p28) target = $region21
    $region20: #{tpu_custom_call.1} parent=1 // pred_region
      %vm31 = vcmask 7168
      %32 = vst.msk [vmem:[#allocation2] sm:$0xff] %vm31, 0.0
    $region21: #{tpu_custom_call.1} parent=1 // pred_fallthru
      _
    %v33 = vld [vmem:[#allocation4] sm:$0xff]
    %v34 = vld [vmem:[%s1] sm:$0x1]
    %v36 = vlaneseq
    %v37 = vshrl.u32 %v36, 7
    %v38 = vsub.s32 0, %v37
    %v39 = vrot.slane %v34, %v38
    %v41 = vmul.f32 %v33, %v39
    %v42 = vld [vmem:[#allocation2] sm:$0xff]
    %vm43 = vcmask 261120
    %v44 = vsel %vm43, %v41, 0.0
    %45 = vadd.xlane.f32.xlu0 %v44
    %v46 = vpop.xlane.xlu0 %45
    %v47 = vadd.f32 %v42, %v46
    %vm48 = vcmask 7168
    %49 = vst.msk [vmem:[#allocation2] sm:$0xff] %vm48, %v47
    // Predicated region
    $region22: #{tpu_custom_call.1} parent=1 // pred_check
      %p50 = pneg %p27
    $region23: #{tpu_custom_call.1} parent=1 // pred_check_branch
      %52 = sbr.rel (%p50) target = $region25
    $region24: #{tpu_custom_call.1} parent=1 // pred_region
      %v53 = vld [vmem:[#allocation2] sm:$0xff]
      %s54 = sld [smem:[#allocation3]]
      %v55 = vstv %s54
      %v56 = vadd.f32 %v53, %v55
      %v57 = vxor.u32 %v56, 2147483648
      %v58 = vmul.f32 %v57, 1.442695
      %v59 = vpow.pop %v58
      %v60 = vadd.f32 %v59, 1.0
      %v61 = vrcp.pop %v60
      %v62 = vmul.f32 1.0, %v61
      %63 = vst.msk [vmem:[%s3] sm:$0xff] %vm48, %v62
    $region25: #{tpu_custom_call.1} parent=1 // pred_fallthru
      _
    // Predicated region
    $region26: #{tpu_custom_call.1} parent=1 // pred_check
      _
    $region27: #{tpu_custom_call.1} parent=1 // pred_check_branch
      %65 = sbr.rel (0) target = $region29
    $region28: #{tpu_custom_call.1} parent=1 // pred_region
      _
    $region29: #{tpu_custom_call.1} parent=1 // pred_fallthru
      _
    // Predicated region
    $region30: #{tpu_custom_call.1} parent=1 // pred_check
      _
    $region31: #{tpu_custom_call.1} parent=1 // pred_check_branch
      %67 = sbr.rel (0) target = $region33
    $region32: #{tpu_custom_call.1} parent=1 // pred_region
      _
    $region33: #{tpu_custom_call.1} parent=1 // pred_fallthru
      _
    %68 = vsyncpa [#allocation5], 1

</llo_original>
